<compile_context>
chip_gen: v6e
topology: v6e:2x2x1
jax: 0.10.0
libtpu: 0.0.40
codegen_flags: <defaults>
</compile_context>

<pallas_src>
import functools

import jax
import jax.numpy as jnp
from jax.experimental import pallas as pl
from jax.experimental.pallas import tpu as pltpu

_VMEM_LIMIT = 48 * 1024 * 1024


def _proj_scores_kernel(x_ref, waug_ref, proj_ref, s_ref, *, hf):
    """Fused projection + per-head attention scores for one node-row tile.

    x_ref:    (TM, f_in)          node features
    waug_ref: (f_in, hf + 2H)     [W | W @ S] (S = block-diag scoring matrix)
    proj_ref: (TM, hf)   bf16     projections (consumed by the bf16 agg matmul)
    s_ref:    (TM, 2H)   f32      [scores_source | scores_target]
    """
    res = jnp.dot(x_ref[...], waug_ref[...], preferred_element_type=jnp.float32)
    proj_ref[...] = res[:, :hf].astype(jnp.bfloat16)
    s_ref[...] = res[:, hf:]


def _attn_aggregate_kernel(*refs, num_heads, f_out, concat, use_elu,
                           skip_identity):
    """Online-softmax attention + neighbor aggregation, tiled over sources.

    Grid = (row tiles ["parallel"], source tiles ["arbitrary"]).

    inputs : adj (TM, TK) int8, s_trg (TM, H), s_src^T (H, TK),
             proj (TK, hf) bf16, x (TM, f_in), [skip_w (f_in, hf)],
             bias (1, out_cols)
    output : out (TM, out_cols)   -- written only at the last source tile
    scratch: m (TM, H), l (TM, H), acc (TM, hf)   f32, persist across k
    """
    if skip_identity:
        (adj_ref, strg_ref, ssrc_ref, proj_ref, x_ref, bias_ref,
         out_ref, m_sc, l_sc, acc_sc) = refs
        skipw_ref = None
    else:
        (adj_ref, strg_ref, ssrc_ref, proj_ref, x_ref, skipw_ref, bias_ref,
         out_ref, m_sc, l_sc, acc_sc) = refs

    k = pl.program_id(1)
    nk = pl.num_programs(1)

    @pl.when(k == 0)
    def _():
        m_sc[...] = jnp.full(m_sc.shape, -1e30, dtype=jnp.float32)
        l_sc[...] = jnp.zeros(l_sc.shape, dtype=jnp.float32)
        acc_sc[...] = jnp.zeros(acc_sc.shape, dtype=jnp.float32)

    mask = adj_ref[...] > 0                       # (TM, TK) bool
    strg = strg_ref[...]                          # (TM, H)  f32
    ssrc = ssrc_ref[...]                          # (H, TK)  f32
    proj = proj_ref[...]                          # (TK, hf) bf16
    neg = jnp.float32(-1e30)

    for h in range(num_heads):
        sl = slice(h * f_out, (h + 1) * f_out)
        # Recompute scores on the fly -- no (H, N, N) intermediates ever.
        e = strg[:, h:h + 1] + ssrc[h:h + 1, :]                  # (TM, TK)
        e = jnp.where(e > 0, e, 0.2 * e)                         # LeakyReLU(0.2)
        e_m = jnp.where(mask, e, neg)                            # masked scores
        m_old = m_sc[:, h:h + 1]                                 # (TM, 1)
        m_new = jnp.maximum(m_old, jnp.max(e_m, axis=1, keepdims=True))
        alpha = jnp.exp(m_old - m_new)                           # rescale factor
        # Non-edges are forced to exactly 0 regardless of m_new (handles rows
        # with no edges seen yet, where m_new is still -1e30).
        p = jnp.where(mask, jnp.exp(e - m_new), 0.0)             # (TM, TK) f32
        l_sc[:, h:h + 1] = alpha * l_sc[:, h:h + 1] + jnp.sum(
            p, axis=1, keepdims=True)
        agg = jnp.dot(p.astype(jnp.bfloat16), proj[:, sl],
                      preferred_element_type=jnp.float32)        # (TM, f_out)
        acc_sc[:, sl] = alpha * acc_sc[:, sl] + agg
        m_sc[:, h:h + 1] = m_new

    @pl.when(k == nk - 1)
    def _():
        x_t = x_ref[...]                                          # (TM, f_in)
        if not skip_identity:
            skip_all = jnp.dot(x_t, skipw_ref[...],
                               preferred_element_type=jnp.float32)  # (TM, hf)
        bias = bias_ref[...]
        if concat:
            for h in range(num_heads):
                sl = slice(h * f_out, (h + 1) * f_out)
                v = acc_sc[:, sl] / (l_sc[:, h:h + 1] + 1e-16)
                v = v + (x_t if skip_identity else skip_all[:, sl])
                v = v + bias[:, sl]
                if use_elu:
                    v = jnp.where(v > 0, v, jnp.expm1(v))         # ELU(alpha=1)
                out_ref[:, sl] = v
        else:
            acc = None
            for h in range(num_heads):
                sl = slice(h * f_out, (h + 1) * f_out)
                v = acc_sc[:, sl] / (l_sc[:, h:h + 1] + 1e-16)
                v = v + (x_t if skip_identity else skip_all[:, sl])
                acc = v if acc is None else acc + v
            out = acc * (1.0 / float(num_heads)) + bias
            if use_elu:
                out = jnp.where(out > 0, out, jnp.expm1(out))
            out_ref[...] = out


def gat_layer_forward(x_pad, adj, layer, tile_m, tile_k):
    n_pad, f_in = x_pad.shape
    num_heads = layer["num_heads"]
    f_out = layer["f_out"]
    hf = num_heads * f_out
    concat = layer["concat"]
    use_elu = layer["use_elu"]
    skip_identity = (f_out == f_in)
    assert layer["f_in"] == f_in
    assert n_pad % tile_m == 0 and n_pad % tile_k == 0
    num_row_tiles = n_pad // tile_m
    num_k_tiles = n_pad // tile_k

    # ---- Kernel 1: fused projection + scores (one lane-dense matmul) ----
    proj, s_all = pl.pallas_call(
        functools.partial(_proj_scores_kernel, hf=hf),
        out_shape=(jax.ShapeDtypeStruct((n_pad, hf), jnp.bfloat16),
                   jax.ShapeDtypeStruct((n_pad, 2 * num_heads), jnp.float32)),
        grid=(num_row_tiles,),
        in_specs=[pl.BlockSpec((tile_m, f_in), lambda i: (i, 0)),
                  pl.BlockSpec((f_in, hf + 2 * num_heads), lambda i: (0, 0))],
        out_specs=(pl.BlockSpec((tile_m, hf), lambda i: (i, 0)),
                   pl.BlockSpec((tile_m, 2 * num_heads), lambda i: (i, 0))),
        compiler_params=pltpu.CompilerParams(
            dimension_semantics=("parallel",),
            vmem_limit_bytes=_VMEM_LIMIT),
    )(x_pad, layer["w_aug"])

    s_src_t = jnp.transpose(s_all[:, :num_heads])   # (H, Npad) source scores
    s_trg = s_all[:, num_heads:]                    # (Npad, H) target scores

    # ---- Kernel 2: tiled attention + aggregation (online softmax) ----
    out_cols = hf if concat else f_out
    kernel = functools.partial(
        _attn_aggregate_kernel,
        num_heads=num_heads, f_out=f_out, concat=concat, use_elu=use_elu,
        skip_identity=skip_identity)

    args = [adj, s_trg, s_src_t, proj, x_pad]
    in_specs = [
        pl.BlockSpec((tile_m, tile_k), lambda i, k: (i, k)),          # adj int8
        pl.BlockSpec((tile_m, num_heads), lambda i, k: (i, 0)),       # s_trg
        pl.BlockSpec((num_heads, tile_k), lambda i, k: (0, k)),       # s_src^T
        pl.BlockSpec((tile_k, hf), lambda i, k: (k, 0)),              # proj bf16
        pl.BlockSpec((tile_m, f_in), lambda i, k: (i, 0)),            # x (skip)
    ]
    if not skip_identity:
        args.append(layer["skip_w"])
        in_specs.append(pl.BlockSpec((f_in, hf), lambda i, k: (0, 0)))
    args.append(layer["bias"])
    in_specs.append(pl.BlockSpec((1, out_cols), lambda i, k: (0, 0)))

    out = pl.pallas_call(
        kernel,
        out_shape=jax.ShapeDtypeStruct((n_pad, out_cols), jnp.float32),
        grid=(num_row_tiles, num_k_tiles),
        in_specs=in_specs,
        out_specs=pl.BlockSpec((tile_m, out_cols), lambda i, k: (i, 0)),
        scratch_shapes=[pltpu.VMEM((tile_m, num_heads), jnp.float32),   # m
                        pltpu.VMEM((tile_m, num_heads), jnp.float32),   # l
                        pltpu.VMEM((tile_m, hf), jnp.float32)],         # acc
        compiler_params=pltpu.CompilerParams(
            dimension_semantics=("parallel", "arbitrary"),
            vmem_limit_bytes=_VMEM_LIMIT),
    )(*args)

    return out  # node-major (Npad, hf) or (Npad, f_out); stays padded


def _pick_tile(pref, n_pad):
    t = min(pref, n_pad)
    while n_pad % t != 0:
        t -= 128
    return t


def gat_forward(x, edge_index, layers, tile_m=256, tile_k=512):
    n = x.shape[0]
    n_pad = ((n + 127) // 128) * 128
    tm = _pick_tile(tile_m, n_pad)
    tk = _pick_tile(tile_k, n_pad)
    x_pad = jnp.zeros((n_pad, x.shape[1]), jnp.float32).at[:n].set(
        x.astype(jnp.float32))
    src = edge_index[0]
    trg = edge_index[1]
    # Dense int8 adjacency: adj[t, s] = 1 iff edge s -> t; padded rows/cols 0.
    adj = jnp.zeros((n_pad, n_pad), jnp.int8).at[trg, src].set(1)
    h = x_pad
    for layer in layers:
        h = gat_layer_forward(h, adj, layer, tm, tk)
    return h[:n], edge_index


def _xavier_uniform(key, shape, fan_in, fan_out):
    bound = (6.0 / (fan_in + fan_out)) ** 0.5
    return jax.random.uniform(key, shape, jnp.float32, -bound, bound)


def build_gat_params(key, num_of_layers, num_heads_per_layer,
                     num_features_per_layer):
    assert num_of_layers == len(num_heads_per_layer) == len(num_features_per_layer) - 1
    heads = [1] + list(num_heads_per_layer)
    layers = []
    for i in range(num_of_layers):
        f_in = num_features_per_layer[i] * heads[i]
        f_out = num_features_per_layer[i + 1]
        h = heads[i + 1]
        hf = h * f_out
        concat = i < num_of_layers - 1
        use_elu = i < num_of_layers - 1
        key, k1, k2, k3, k4 = jax.random.split(key, 5)
        w = _xavier_uniform(k1, (f_in, hf), f_in, hf)
        a_src = _xavier_uniform(k2, (h, f_out), f_out, f_out)
        a_trg = _xavier_uniform(k3, (h, f_out), f_out, f_out)
        # Block-diagonal scoring matrix S = [S_src | S_trg], folded into the
        # projection weight: W_aug = [W | W @ S], shape (f_in, hf + 2H).
        eye = jnp.eye(h, dtype=jnp.float32)
        smat_src = (a_src[:, :, None] * eye[:, None, :]).reshape(hf, h)
        smat_trg = (a_trg[:, :, None] * eye[:, None, :]).reshape(hf, h)
        smat = jnp.concatenate([smat_src, smat_trg], axis=1)     # (hf, 2H)
        w_aug = jnp.concatenate([w, jnp.dot(w, smat)], axis=1)   # (f_in, hf+2H)
        layers.append(dict(
            w_aug=w_aug,
            skip_w=_xavier_uniform(k4, (f_in, hf), f_in, hf),
            bias=jnp.zeros((1, hf if concat else f_out), jnp.float32),
            concat=concat, use_elu=use_elu,
            num_heads=h, f_in=f_in, f_out=f_out,
        ))
    return layers


if __name__ == "__main__":
    key = jax.random.PRNGKey(0)
    n_nodes = 32
    num_of_layers = 2
    num_heads_per_layer = [2, 2]
    num_features_per_layer = [16, 16, 8]

    kx, kp = jax.random.split(key)
    x = jax.random.normal(kx, (n_nodes, num_features_per_layer[0]), jnp.float32)

    # Deterministic unique edge list: each target node t receives edges from
    # sources (t + k) % N, k in {0,1,2,3} (includes a self-loop).
    deg = 4
    trg = jnp.repeat(jnp.arange(n_nodes, dtype=jnp.int32), deg)
    offs = jnp.tile(jnp.arange(deg, dtype=jnp.int32), n_nodes)
    src = (trg + offs) % n_nodes
    edge_index = jnp.stack([src, trg], axis=0)

    layers = build_gat_params(kp, num_of_layers, num_heads_per_layer,
                              num_features_per_layer)

    out, _ = gat_forward(x, edge_index, layers)
    jax.block_until_ready(out)
    assert out.shape == (n_nodes, num_features_per_layer[-1])
    print("KERNEL_OK")
</pallas_src>

<mosaic_0001>
module attributes {stable_mosaic.version = 11 : i64} {
  func.func @_proj_scores_kernel(%arg0: i32, %arg1: memref<128x16xf32, #tpu.memory_space<vmem>>, %arg2: memref<16x36xf32, #tpu.memory_space<vmem>>, %arg3: memref<128x32xbf16, #tpu.memory_space<vmem>>, %arg4: memref<128x4xf32, #tpu.memory_space<vmem>>) attributes {dimension_semantics = [#tpu.dimension_semantics<parallel>], iteration_bounds = array<i64: 1>, scalar_prefetch = 0 : i64, scratch_operands = 0 : i64, tpu.core_type = #tpu.core_type<tc>, window_params = [{transform_indices = @transform_0, window_bounds = array<i64: 128, 16>}, {pipeline_mode = #tpu.pipeline_mode<synchronous>, transform_indices = @transform_1, window_bounds = array<i64: 16, 36>}, {transform_indices = @transform_2, window_bounds = array<i64: 128, 32>}, {transform_indices = @transform_3, window_bounds = array<i64: 128, 4>}]} {
    %c0 = arith.constant 0 : index
    %c0_0 = arith.constant 0 : index
    %0 = vector.load %arg1[%c0, %c0_0] : memref<128x16xf32, #tpu.memory_space<vmem>>, vector<128x16xf32>
    %c0_1 = arith.constant 0 : index
    %c0_2 = arith.constant 0 : index
    %1 = vector.load %arg2[%c0_1, %c0_2] : memref<16x36xf32, #tpu.memory_space<vmem>>, vector<16x36xf32>
    %cst = arith.constant dense<0.000000e+00> : vector<128x36xf32>
    %2 = tpu.matmul %0, %1, %cst {dimension_numbers = #tpu.dot_dimension_numbers<[1], [0], [0], [1], [0, 0, 1, 1], [], []>} : vector<128x16xf32>, vector<16x36xf32>, vector<128x36xf32> -> vector<128x36xf32>
    %3 = vector.extract_strided_slice %2 {offsets = [0, 0], sizes = [128, 32], strides = [1, 1]} : vector<128x36xf32> to vector<128x32xf32>
    %4 = arith.truncf %3 : vector<128x32xf32> to vector<128x32xbf16>
    %c0_3 = arith.constant 0 : index
    %c0_4 = arith.constant 0 : index
    %5 = vector.load %arg3[%c0_3, %c0_4] : memref<128x32xbf16, #tpu.memory_space<vmem>>, vector<128x32xbf16>
    tpu.vector_store %arg3[%c0_3, %c0_4], %4 {strides = array<i32>} : memref<128x32xbf16, #tpu.memory_space<vmem>>, vector<128x32xbf16>,
    %6 = vector.extract_strided_slice %2 {offsets = [0, 32], sizes = [128, 4], strides = [1, 1]} : vector<128x36xf32> to vector<128x4xf32>
    %c0_5 = arith.constant 0 : index
    %c0_6 = arith.constant 0 : index
    %7 = vector.load %arg4[%c0_5, %c0_6] : memref<128x4xf32, #tpu.memory_space<vmem>>, vector<128x4xf32>
    tpu.vector_store %arg4[%c0_5, %c0_6], %6 {strides = array<i32>} : memref<128x4xf32, #tpu.memory_space<vmem>>, vector<128x4xf32>,
    return
  }
  func.func @transform_0(%arg0: i32) -> (i32, i32) {
    %c0_i32 = arith.constant 0 : i32
    %c0_i32_0 = arith.constant 0 : i32
    return %arg0, %c0_i32 : i32, i32
  }
  func.func @transform_1(%arg0: i32) -> (i32, i32) {
    %c0_i32 = arith.constant 0 : i32
    %c0_i32_0 = arith.constant 0 : i32
    %c0_i32_1 = arith.constant 0 : i32
    return %c0_i32, %c0_i32_0 : i32, i32
  }
  func.func @transform_2(%arg0: i32) -> (i32, i32) {
    %c0_i32 = arith.constant 0 : i32
    %c0_i32_0 = arith.constant 0 : i32
    return %arg0, %c0_i32 : i32, i32
  }
  func.func @transform_3(%arg0: i32) -> (i32, i32) {
    %c0_i32 = arith.constant 0 : i32
    %c0_i32_0 = arith.constant 0 : i32
    return %arg0, %c0_i32 : i32, i32
  }
}

</mosaic_0001>

<llo_original>
// kernel: tpu_custom_call.1
$region0: #{tpu_custom_call.1}
  #allocation0 [shape = 'u32[]', space=smem, size = 0x4, offset = 0x4, fixed_abs, tag = 'smem constant byte address 0x4 - core index']
  #allocation1 [shape = 'u32[144,128]{1,0:T(1,128)}', space=vmem, size = 0x12000, scoped, tag = 'internal scratch']
  %s0 = inlined_call_operand.vmem [shape: f32[128,16], index: 0, kind: input, shape index: {}]
  %s1 = inlined_call_operand.vmem [shape: f32[16,36], index: 1, kind: input, shape index: {}]
  %s2 = inlined_call_operand.vmem [shape: bf16[128,32], index: 2, kind: output, shape index: {0}]
  %s3 = inlined_call_operand.vmem [shape: f32[128,4], index: 3, kind: output, shape index: {1}]
  %4 = xla_tuple %s2, %s3
  %s5 = sld [smem:[#allocation0]]
  $region26: #{tpu_custom_call.1} parent=0
    _
  %s7 = ssub.s32 1, %s5
  %s8 = scalar_select 0, %s7, %s5
  // Predicated region
  $region2: #{tpu_custom_call.1} parent=0 // pred_check
    _
  $region3: #{tpu_custom_call.1} parent=0 // pred_check_branch
    %10 = sbr.rel (0) target = $region5
  $region4: #{tpu_custom_call.1} parent=0 // pred_region
    _
  $region5: #{tpu_custom_call.1} parent=0 // pred_fallthru
    _
  // Predicated region
  $region6: #{tpu_custom_call.1} parent=0 // pred_check
    _
  $region7: #{tpu_custom_call.1} parent=0 // pred_check_branch
    %12 = sbr.rel (0) target = $region9
  $region8: #{tpu_custom_call.1} parent=0 // pred_region
    _
  $region9: #{tpu_custom_call.1} parent=0 // pred_fallthru
    _
  %v13 = vld [vmem:[%s0] sm:$0xff]
  %v14 = vld [vmem:[%s0 + $0x8] sm:$0xff]
  %v15 = vld [vmem:[%s0 + $0x10] sm:$0xff]
  %v16 = vld [vmem:[%s0 + $0x18] sm:$0xff]
  %v17 = vld [vmem:[%s0 + $0x20] sm:$0xff]
  %v18 = vld [vmem:[%s0 + $0x28] sm:$0xff]
  %v19 = vld [vmem:[%s0 + $0x30] sm:$0xff]
  %v20 = vld [vmem:[%s0 + $0x38] sm:$0xff]
  %v21 = vld [vmem:[%s0 + $0x40] sm:$0xff]
  %v22 = vld [vmem:[%s0 + $0x48] sm:$0xff]
  %v23 = vld [vmem:[%s0 + $0x50] sm:$0xff]
  %v24 = vld [vmem:[%s0 + $0x58] sm:$0xff]
  %v25 = vld [vmem:[%s0 + $0x60] sm:$0xff]
  %v26 = vld [vmem:[%s0 + $0x68] sm:$0xff]
  %v27 = vld [vmem:[%s0 + $0x70] sm:$0xff]
  %v28 = vld [vmem:[%s0 + $0x78] sm:$0xff]
  %v29 = vld [vmem:[%s1] sm:$0xff]
  %v30 = vld [vmem:[%s1 + $0x8] sm:$0xff]
  %vm31 = vcmask 130048
  %v33 = vsel %vm31, %v13, 0
  %v36 = vsel %vm31, %v14, 0
  %v39 = vsel %vm31, %v15, 0
  %v42 = vsel %vm31, %v16, 0
  %v45 = vsel %vm31, %v17, 0
  %v48 = vsel %vm31, %v18, 0
  %v51 = vsel %vm31, %v19, 0
  %v54 = vsel %vm31, %v20, 0
  %v57 = vsel %vm31, %v21, 0
  %v60 = vsel %vm31, %v22, 0
  %v63 = vsel %vm31, %v23, 0
  %v66 = vsel %vm31, %v24, 0
  %v69 = vsel %vm31, %v25, 0
  %v72 = vsel %vm31, %v26, 0
  %v75 = vsel %vm31, %v27, 0
  %v78 = vsel %vm31, %v28, 0
  %80 = vmatprep.subr.mxu0 0.0
  %81 = vmatpush1.msra.mxu0 0.0
  %82 = vmatprep.subr.mxu0 0.0
  %83 = vmatpush1.msra.mxu0 0.0
  %84 = vmatprep.subr.mxu0 0.0
  %85 = vmatpush1.msra.mxu0 0.0
  %86 = vmatprep.subr.mxu0 0.0
  %87 = vmatpush1.msra.mxu0 0.0
  %88 = vmatprep.subr.mxu0 0.0
  %89 = vmatpush1.msra.mxu0 0.0
  %90 = vmatprep.subr.mxu0 0.0
  %91 = vmatpush1.msra.mxu0 0.0
  %92 = vmatprep.subr.mxu0 0.0
  %93 = vmatpush1.msra.mxu0 0.0
  %94 = vmatprep.subr.mxu0 0.0
  %95 = vmatpush1.msra.mxu0 0.0
  %96 = vmatprep.subr.mxu0 0.0
  %97 = vmatpush1.msra.mxu0 0.0
  %98 = vmatprep.subr.mxu0 0.0
  %99 = vmatpush1.msra.mxu0 0.0
  %100 = vmatprep.subr.mxu0 0.0
  %101 = vmatpush1.msra.mxu0 0.0
  %102 = vmatprep.subr.mxu0 0.0
  %103 = vmatpush1.msra.mxu0 0.0
  %104 = vmatprep.subr.mxu0 0.0
  %105 = vmatpush1.msra.mxu0 0.0
  %106 = vmatprep.subr.mxu0 0.0
  %107 = vmatpush1.msra.mxu0 0.0
  %108 = vmatprep.subr.mxu0 0.0
  %109 = vmatpush1.msra.mxu0 %v30
  %110 = vmatprep.subr.mxu0 0.0
  %111 = vmatpush1.msra.mxu0 %v29
  %112 = vmatprep.subr.mxu0 0.0
  %113 = vmatpush2.msra.mxu0 0.0
  %114 = vmatprep.subr.mxu0 0.0
  %115 = vmatpush2.msra.mxu0 0.0
  %116 = vmatprep.subr.mxu0 0.0
  %117 = vmatpush2.msra.mxu0 0.0
  %118 = vmatprep.subr.mxu0 0.0
  %119 = vmatpush2.msra.mxu0 0.0
  %120 = vmatprep.subr.mxu0 0.0
  %121 = vmatpush2.msra.mxu0 0.0
  %122 = vmatprep.subr.mxu0 0.0
  %123 = vmatpush2.msra.mxu0 0.0
  %124 = vmatprep.subr.mxu0 0.0
  %125 = vmatpush2.msra.mxu0 0.0
  %126 = vmatprep.subr.mxu0 0.0
  %127 = vmatpush2.msra.mxu0 0.0
  %128 = vmatprep.subr.mxu0 0.0
  %129 = vmatpush2.msra.mxu0 0.0
  %130 = vmatprep.subr.mxu0 0.0
  %131 = vmatpush2.msra.mxu0 0.0
  %132 = vmatprep.subr.mxu0 0.0
  %133 = vmatpush2.msra.mxu0 0.0
  %134 = vmatprep.subr.mxu0 0.0
  %135 = vmatpush2.msra.mxu0 0.0
  %136 = vmatprep.subr.mxu0 0.0
  %137 = vmatpush2.msra.mxu0 0.0
  %138 = vmatprep.subr.mxu0 0.0
  %139 = vmatpush2.msra.mxu0 0.0
  %140 = vmatprep.subr.mxu0 0.0
  %141 = vmatpush2.msra.mxu0 0.0
  %142 = vmatprep.subr.mxu0 0.0
  %143 = vmatpush2.msra.mxu0 0.0
  %144 = vmatprep.mubr.f32.mxu0 0.0
  %145 = vmatmul.mubr.f32.gmra.mxu0 %v33
  %v146 = vpop.f32.mrf.mxu0
  %v147 = vadd.f32 0.0, %v146
  %v148 = vpop.f32.mrf.mxu0
  %149 = vmatprep.mubr.f32.mxu0 0.0
  %150 = vmatmul.mubr.f32.gmra.mxu0 %v36
  %v151 = vpop.f32.mrf.mxu0
  %v152 = vadd.f32 0.0, %v151
  %v153 = vpop.f32.mrf.mxu0
  %154 = vmatprep.mubr.f32.mxu0 0.0
  %155 = vmatmul.mubr.f32.gmra.mxu0 %v39
  %v156 = vpop.f32.mrf.mxu0
  %v157 = vadd.f32 0.0, %v156
  %v158 = vpop.f32.mrf.mxu0
  %159 = vmatprep.mubr.f32.mxu0 0.0
  %160 = vmatmul.mubr.f32.gmra.mxu0 %v42
  %v161 = vpop.f32.mrf.mxu0
  %v162 = vadd.f32 0.0, %v161
  %v163 = vpop.f32.mrf.mxu0
  %164 = vmatprep.mubr.f32.mxu0 0.0
  %165 = vmatmul.mubr.f32.gmra.mxu0 %v45
  %v166 = vpop.f32.mrf.mxu0
  %v167 = vadd.f32 0.0, %v166
  %v168 = vpop.f32.mrf.mxu0
  %169 = vmatprep.mubr.f32.mxu0 0.0
  %170 = vmatmul.mubr.f32.gmra.mxu0 %v48
  %v171 = vpop.f32.mrf.mxu0
  %v172 = vadd.f32 0.0, %v171
  %v173 = vpop.f32.mrf.mxu0
  %174 = vmatprep.mubr.f32.mxu0 0.0
  %175 = vmatmul.mubr.f32.gmra.mxu0 %v51
  %v176 = vpop.f32.mrf.mxu0
  %v177 = vadd.f32 0.0, %v176
  %v178 = vpop.f32.mrf.mxu0
  %179 = vmatprep.mubr.f32.mxu0 0.0
  %180 = vmatmul.mubr.f32.gmra.mxu0 %v54
  %v181 = vpop.f32.mrf.mxu0
  %v182 = vadd.f32 0.0, %v181
  %v183 = vpop.f32.mrf.mxu0
  %184 = vmatprep.mubr.f32.mxu0 0.0
  %185 = vmatmul.mubr.f32.gmra.mxu0 %v57
  %v186 = vpop.f32.mrf.mxu0
  %v187 = vadd.f32 0.0, %v186
  %v188 = vpop.f32.mrf.mxu0
  %189 = vmatprep.mubr.f32.mxu0 0.0
  %190 = vmatmul.mubr.f32.gmra.mxu0 %v60
  %v191 = vpop.f32.mrf.mxu0
  %v192 = vadd.f32 0.0, %v191
  %v193 = vpop.f32.mrf.mxu0
  %194 = vmatprep.mubr.f32.mxu0 0.0
  %195 = vmatmul.mubr.f32.gmra.mxu0 %v63
  %v196 = vpop.f32.mrf.mxu0
  %v197 = vadd.f32 0.0, %v196
  %v198 = vpop.f32.mrf.mxu0
  %199 = vmatprep.mubr.f32.mxu0 0.0
  %200 = vmatmul.mubr.f32.gmra.mxu0 %v66
  %v201 = vpop.f32.mrf.mxu0
  %v202 = vadd.f32 0.0, %v201
  %v203 = vpop.f32.mrf.mxu0
  %204 = vmatprep.mubr.f32.mxu0 0.0
  %205 = vmatmul.mubr.f32.gmra.mxu0 %v69
  %v206 = vpop.f32.mrf.mxu0
  %v207 = vadd.f32 0.0, %v206
  %v208 = vpop.f32.mrf.mxu0
  %209 = vmatprep.mubr.f32.mxu0 0.0
  %210 = vmatmul.mubr.f32.gmra.mxu0 %v72
  %v211 = vpop.f32.mrf.mxu0
  %v212 = vadd.f32 0.0, %v211
  %v213 = vpop.f32.mrf.mxu0
  %214 = vmatprep.mubr.f32.mxu0 0.0
  %215 = vmatmul.mubr.f32.gmra.mxu0 %v75
  %v216 = vpop.f32.mrf.mxu0
  %v217 = vadd.f32 0.0, %v216
  %v218 = vpop.f32.mrf.mxu0
  %219 = vmatprep.mubr.f32.mxu0 0.0
  %220 = vmatmul.mubr.f32.gmra.mxu0 %v78
  %v221 = vpop.f32.mrf.mxu0
  %v222 = vadd.f32 0.0, %v221
  %v223 = vpop.f32.mrf.mxu0
  %224 = vdwg.mxu0
  %v225 = vpack.c.bf16 %v152, %v147
  %v226 = vpack.c.bf16 %v162, %v157
  %v227 = vpack.c.bf16 %v172, %v167
  %v228 = vpack.c.bf16 %v182, %v177
  %v229 = vpack.c.bf16 %v192, %v187
  %v230 = vpack.c.bf16 %v202, %v197
  %v231 = vpack.c.bf16 %v212, %v207
  %v232 = vpack.c.bf16 %v222, %v217
  %v241 = vunpack.c.l.b16 %v225
  %v242 = vunpack.c.h.b16 %v225
  %v243 = vunpack.c.l.b16 %v226
  %v244 = vunpack.c.h.b16 %v226
  %v245 = vunpack.c.l.b16 %v227
  %v246 = vunpack.c.h.b16 %v227
  %v247 = vunpack.c.l.b16 %v228
  %v248 = vunpack.c.h.b16 %v228
  %v249 = vunpack.c.l.b16 %v229
  %v250 = vunpack.c.h.b16 %v229
  %v251 = vunpack.c.l.b16 %v230
  %v252 = vunpack.c.h.b16 %v230
  %v253 = vunpack.c.l.b16 %v231
  %v254 = vunpack.c.h.b16 %v231
  %v255 = vunpack.c.l.b16 %v232
  %v256 = vunpack.c.h.b16 %v232
  %v257 = vpack.c.b16 %v241, %v241
  %v258 = vpack.c.b16 %v242, %v242
  %v259 = vpack.c.b16 %v243, %v243
  %v260 = vpack.c.b16 %v244, %v244
  %v261 = vpack.c.b16 %v245, %v245
  %v262 = vpack.c.b16 %v246, %v246
  %v263 = vpack.c.b16 %v247, %v247
  %v264 = vpack.c.b16 %v248, %v248
  %v265 = vpack.c.b16 %v249, %v249
  %v266 = vpack.c.b16 %v250, %v250
  %v267 = vpack.c.b16 %v251, %v251
  %v268 = vpack.c.b16 %v252, %v252
  %v269 = vpack.c.b16 %v253, %v253
  %v270 = vpack.c.b16 %v254, %v254
  %v271 = vpack.c.b16 %v255, %v255
  %v272 = vpack.c.b16 %v256, %v256
  %vm289 = vcmask 257024
  %290 = vst.msk [vmem:[%s2] sm:$0xf] %vm289, %v257
  %291 = vst.msk [vmem:[%s2 + $0x4] sm:$0xf] %vm289, %v258
  %292 = vst.msk [vmem:[%s2 + $0x8] sm:$0xf] %vm289, %v259
  %293 = vst.msk [vmem:[%s2 + $0xc] sm:$0xf] %vm289, %v260
  %294 = vst.msk [vmem:[%s2 + $0x10] sm:$0xf] %vm289, %v261
  %295 = vst.msk [vmem:[%s2 + $0x14] sm:$0xf] %vm289, %v262
  %296 = vst.msk [vmem:[%s2 + $0x18] sm:$0xf] %vm289, %v263
  %297 = vst.msk [vmem:[%s2 + $0x1c] sm:$0xf] %vm289, %v264
  %298 = vst.msk [vmem:[%s2 + $0x20] sm:$0xf] %vm289, %v265
  %299 = vst.msk [vmem:[%s2 + $0x24] sm:$0xf] %vm289, %v266
  %300 = vst.msk [vmem:[%s2 + $0x28] sm:$0xf] %vm289, %v267
  %301 = vst.msk [vmem:[%s2 + $0x2c] sm:$0xf] %vm289, %v268
  %302 = vst.msk [vmem:[%s2 + $0x30] sm:$0xf] %vm289, %v269
  %303 = vst.msk [vmem:[%s2 + $0x34] sm:$0xf] %vm289, %v270
  %304 = vst.msk [vmem:[%s2 + $0x38] sm:$0xf] %vm289, %v271
  %305 = vst.msk [vmem:[%s2 + $0x3c] sm:$0xf] %vm289, %v272
  %322 = vrot.lane.b32.xlu0 %v147, 96
  %v323 = vpop.permute.xlu0 %322
  %324 = vrot.lane.b32.xlu0 %v152, 96
  %v325 = vpop.permute.xlu0 %324
  %326 = vrot.lane.b32.xlu0 %v157, 96
  %v327 = vpop.permute.xlu0 %326
  %328 = vrot.lane.b32.xlu0 %v162, 96
  %v329 = vpop.permute.xlu0 %328
  %330 = vrot.lane.b32.xlu0 %v167, 96
  %v331 = vpop.permute.xlu0 %330
  %332 = vrot.lane.b32.xlu0 %v172, 96
  %v333 = vpop.permute.xlu0 %332
  %334 = vrot.lane.b32.xlu0 %v177, 96
  %v335 = vpop.permute.xlu0 %334
  %336 = vrot.lane.b32.xlu0 %v182, 96
  %v337 = vpop.permute.xlu0 %336
  %338 = vrot.lane.b32.xlu0 %v187, 96
  %v339 = vpop.permute.xlu0 %338
  %340 = vrot.lane.b32.xlu0 %v192, 96
  %v341 = vpop.permute.xlu0 %340
  %342 = vrot.lane.b32.xlu0 %v197, 96
  %v343 = vpop.permute.xlu0 %342
  %344 = vrot.lane.b32.xlu0 %v202, 96
  %v345 = vpop.permute.xlu0 %344
  %346 = vrot.lane.b32.xlu0 %v207, 96
  %v347 = vpop.permute.xlu0 %346
  %348 = vrot.lane.b32.xlu0 %v212, 96
  %v349 = vpop.permute.xlu0 %348
  %350 = vrot.lane.b32.xlu0 %v217, 96
  %v351 = vpop.permute.xlu0 %350
  %352 = vrot.lane.b32.xlu0 %v222, 96
  %v353 = vpop.permute.xlu0 %352
  %vm370 = vcmask 31744
  %371 = vst.msk [vmem:[%s3] sm:$0xff] %vm370, %v323
  %372 = vst.msk [vmem:[%s3 + $0x8] sm:$0xff] %vm370, %v325
  %373 = vst.msk [vmem:[%s3 + $0x10] sm:$0xff] %vm370, %v327
  %374 = vst.msk [vmem:[%s3 + $0x18] sm:$0xff] %vm370, %v329
  %375 = vst.msk [vmem:[%s3 + $0x20] sm:$0xff] %vm370, %v331
  %376 = vst.msk [vmem:[%s3 + $0x28] sm:$0xff] %vm370, %v333
  %377 = vst.msk [vmem:[%s3 + $0x30] sm:$0xff] %vm370, %v335
  %378 = vst.msk [vmem:[%s3 + $0x38] sm:$0xff] %vm370, %v337
  %379 = vst.msk [vmem:[%s3 + $0x40] sm:$0xff] %vm370, %v339
  %380 = vst.msk [vmem:[%s3 + $0x48] sm:$0xff] %vm370, %v341
  %381 = vst.msk [vmem:[%s3 + $0x50] sm:$0xff] %vm370, %v343
  %382 = vst.msk [vmem:[%s3 + $0x58] sm:$0xff] %vm370, %v345
  %383 = vst.msk [vmem:[%s3 + $0x60] sm:$0xff] %vm370, %v347
  %384 = vst.msk [vmem:[%s3 + $0x68] sm:$0xff] %vm370, %v349
  %385 = vst.msk [vmem:[%s3 + $0x70] sm:$0xff] %vm370, %v351
  %386 = vst.msk [vmem:[%s3 + $0x78] sm:$0xff] %vm370, %v353
  // Predicated region
  $region10: #{tpu_custom_call.1} parent=0 // pred_check
    _
  $region11: #{tpu_custom_call.1} parent=0 // pred_check_branch
    %388 = sbr.rel (0) target = $region13
  $region12: #{tpu_custom_call.1} parent=0 // pred_region
    _
  $region13: #{tpu_custom_call.1} parent=0 // pred_fallthru
    _
  // Predicated region
  $region14: #{tpu_custom_call.1} parent=0 // pred_check
    _
  $region15: #{tpu_custom_call.1} parent=0 // pred_check_branch
    %390 = sbr.rel (0) target = $region17
  $region16: #{tpu_custom_call.1} parent=0 // pred_region
    _
  $region17: #{tpu_custom_call.1} parent=0 // pred_fallthru
    _
  // Predicated region
  $region18: #{tpu_custom_call.1} parent=0 // pred_check
    _
  $region19: #{tpu_custom_call.1} parent=0 // pred_check_branch
    %392 = sbr.rel (0) target = $region21
  $region20: #{tpu_custom_call.1} parent=0 // pred_region
    _
  $region21: #{tpu_custom_call.1} parent=0 // pred_fallthru
    _
  // Predicated region
  $region22: #{tpu_custom_call.1} parent=0 // pred_check
    _
  $region23: #{tpu_custom_call.1} parent=0 // pred_check_branch
    %394 = sbr.rel (0) target = $region25
  $region24: #{tpu_custom_call.1} parent=0 // pred_region
    _
  $region25: #{tpu_custom_call.1} parent=0 // pred_fallthru
    _

</llo_original>
